<compile_context>
chip_gen: v5e
topology: v5e:2x2
jax: 0.10.0
libtpu: 0.0.40
codegen_flags: <defaults>
</compile_context>

<pallas_src>
import jax
import jax.numpy as jnp
from jax.experimental import pallas as pl
from jax.experimental.pallas import tpu as pltpu

_EPS = 1e-8     # torch.cosine_similarity default eps
_NSTATS = 8     # 5 used stats + 3 zero pad (keeps output lane width a power of two)


def _row_stats_kernel(x_ref, y_ref, o_ref):
    """Per-row partial stats for one (tm, D) tile of out/labels."""
    x = x_ref[...].astype(jnp.float32)
    y = y_ref[...].astype(jnp.float32)
    tm, d = x.shape

    inv_d = jnp.float32(1.0 / d)
    sx = jnp.sum(x, axis=-1, keepdims=True)            # (tm, 1)  Σx per row
    sy = jnp.sum(y, axis=-1, keepdims=True)            # (tm, 1)  Σy per row

    xc = x - sx * inv_d                                 # row-centered
    yc = y - sy * inv_d
    sxy = jnp.sum(xc * yc, axis=-1, keepdims=True)      # Σ xc*yc
    sxx = jnp.sum(xc * xc, axis=-1, keepdims=True)      # Σ xc^2
    syy = jnp.sum(yc * yc, axis=-1, keepdims=True)      # Σ yc^2

    pad = jnp.zeros((tm, _NSTATS - 5), jnp.float32)
    o_ref[...] = jnp.concatenate([sx, sy, sxy, sxx, syy, pad], axis=-1)


def _choose_tile(r, d, itemsize):
    """Largest row tile s.t. 2 inputs x 2 pipeline buffers fit in ~24 MiB of VMEM."""
    budget = 24 * 1024 * 1024
    tm = budget // (4 * d * itemsize)
    tm = min(int(tm), 2048)
    tm = min(tm, int(pl.cdiv(r, 8)) * 8)   # no bigger than (8-rounded) row count
    tm = max(8, (tm // 8) * 8)             # multiple of 8 (sublane granularity)
    return int(tm)


def similarity_loss(out, labels):
    """Pallas implementation of SimilarityLoss.forward(out, labels) -> scalar loss."""
    assert out.shape == labels.shape
    d = out.shape[-1]
    x = out.reshape(-1, d)
    y = labels.reshape(-1, d)
    r = x.shape[0]

    tm = _choose_tile(r, d, x.dtype.itemsize)
    grid = (int(pl.cdiv(r, tm)),)

    stats = pl.pallas_call(
        _row_stats_kernel,
        out_shape=jax.ShapeDtypeStruct((r, _NSTATS), jnp.float32),
        grid=grid,
        in_specs=[
            pl.BlockSpec((tm, d), lambda i: (i, 0)),
            pl.BlockSpec((tm, d), lambda i: (i, 0)),
        ],
        out_specs=pl.BlockSpec((tm, _NSTATS), lambda i: (i, 0)),
        compiler_params=pltpu.CompilerParams(
            dimension_semantics=("parallel",),        # rows are independent (dual-TC on v7x)
            vmem_limit_bytes=48 * 1024 * 1024,        # fit the enlarged tile on all gens
        ),
    )(x, y)

    # ---- tiny epilogue over (R, 8): reconstruct global-mean-centered quantities ----
    sx = stats[:, 0]
    sy = stats[:, 1]
    sxy = stats[:, 2]
    sxx = stats[:, 3]
    syy = stats[:, 4]

    df = jnp.float32(d)
    mx = jnp.sum(sx) / (jnp.float32(r) * df)     # global mean of out
    my = jnp.sum(sy) / (jnp.float32(r) * df)     # global mean of labels
    dx = sx / df - mx                             # (row mean - global mean)
    dy = sy / df - my

    # Σ(x-mx)(y-my) = Σ xc*yc + D*dx*dy ;  Σ(x-mx)^2 = Σ xc^2 + D*dx^2 ; likewise for y
    num = sxy + df * dx * dy
    nxx = sxx + df * dx * dx
    nyy = syy + df * dy * dy

    eps = jnp.float32(_EPS)
    cos = num / jnp.maximum(jnp.sqrt(nxx) * jnp.sqrt(nyy), eps)
    return 1.0 - jnp.mean(cos)


def _reference_loss(out, labels, eps=_EPS):
    """Pure-JAX reference matching torch semantics (two-pass, global mean)."""
    x = (out - jnp.mean(out, dtype=jnp.float32)).astype(jnp.float32)
    y = (labels - jnp.mean(labels, dtype=jnp.float32)).astype(jnp.float32)
    dot = jnp.sum(x * y, axis=-1)
    nx = jnp.sqrt(jnp.sum(x * x, axis=-1))
    ny = jnp.sqrt(jnp.sum(y * y, axis=-1))
    cos = dot / jnp.maximum(nx * ny, eps)
    return 1.0 - jnp.mean(cos)


if __name__ == "__main__":
    key = jax.random.PRNGKey(0)
    k1, k2 = jax.random.split(key)

    # Small shapes consistent with the module: (batch=2, seq=8, hidden=32).
    out = jax.random.normal(k1, (2, 8, 32), dtype=jnp.float32)
    labels = jax.random.normal(k2, (2, 8, 32), dtype=jnp.float32)

    loss = jax.block_until_ready(similarity_loss(out, labels))
    ref = jax.block_until_ready(_reference_loss(out, labels))

    assert jnp.allclose(loss, ref, rtol=1e-5, atol=1e-5), (loss, ref)
    print("KERNEL_OK")
</pallas_src>

<mosaic_0001>
module attributes {stable_mosaic.version = 11 : i64} {
  func.func @_row_stats_kernel(%arg0: i32, %arg1: memref<16x32xf32, #tpu.memory_space<vmem>>, %arg2: memref<16x32xf32, #tpu.memory_space<vmem>>, %arg3: memref<16x8xf32, #tpu.memory_space<vmem>>) attributes {dimension_semantics = [#tpu.dimension_semantics<parallel>], iteration_bounds = array<i64: 1>, scalar_prefetch = 0 : i64, scratch_operands = 0 : i64, tpu.core_type = #tpu.core_type<tc>, window_params = [{transform_indices = @transform_0, window_bounds = array<i64: 16, 32>}, {transform_indices = @transform_1, window_bounds = array<i64: 16, 32>}, {transform_indices = @transform_2, window_bounds = array<i64: 16, 8>}]} {
    %c0 = arith.constant 0 : index
    %c0_0 = arith.constant 0 : index
    %0 = vector.load %arg1[%c0, %c0_0] : memref<16x32xf32, #tpu.memory_space<vmem>>, vector<16x32xf32>
    %c0_1 = arith.constant 0 : index
    %c0_2 = arith.constant 0 : index
    %1 = vector.load %arg2[%c0_1, %c0_2] : memref<16x32xf32, #tpu.memory_space<vmem>>, vector<16x32xf32>
    %cst = arith.constant dense<0.000000e+00> : vector<16xf32>
    %2 = vector.multi_reduction <add>, %0, %cst [1] : vector<16x32xf32> to vector<16xf32>
    %3 = vector.shape_cast %2 : vector<16xf32> to vector<16x1xf32>
    %cst_3 = arith.constant dense<0.000000e+00> : vector<16xf32>
    %4 = vector.multi_reduction <add>, %1, %cst_3 [1] : vector<16x32xf32> to vector<16xf32>
    %5 = vector.shape_cast %4 : vector<16xf32> to vector<16x1xf32>
    %cst_4 = arith.constant 3.125000e-02 : f32
    %6 = vector.broadcast %cst_4 : f32 to vector<16x1xf32>
    %7 = arith.mulf %3, %6 : vector<16x1xf32>
    %8 = vector.broadcast %7 : vector<16x1xf32> to vector<16x32xf32>
    %9 = arith.subf %0, %8 : vector<16x32xf32>
    %cst_5 = arith.constant 3.125000e-02 : f32
    %10 = vector.broadcast %cst_5 : f32 to vector<16x1xf32>
    %11 = arith.mulf %5, %10 : vector<16x1xf32>
    %12 = vector.broadcast %11 : vector<16x1xf32> to vector<16x32xf32>
    %13 = arith.subf %1, %12 : vector<16x32xf32>
    %14 = arith.mulf %9, %13 : vector<16x32xf32>
    %cst_6 = arith.constant dense<0.000000e+00> : vector<16xf32>
    %15 = vector.multi_reduction <add>, %14, %cst_6 [1] : vector<16x32xf32> to vector<16xf32>
    %16 = vector.shape_cast %15 : vector<16xf32> to vector<16x1xf32>
    %17 = arith.mulf %9, %9 : vector<16x32xf32>
    %cst_7 = arith.constant dense<0.000000e+00> : vector<16xf32>
    %18 = vector.multi_reduction <add>, %17, %cst_7 [1] : vector<16x32xf32> to vector<16xf32>
    %19 = vector.shape_cast %18 : vector<16xf32> to vector<16x1xf32>
    %20 = arith.mulf %13, %13 : vector<16x32xf32>
    %cst_8 = arith.constant dense<0.000000e+00> : vector<16xf32>
    %21 = vector.multi_reduction <add>, %20, %cst_8 [1] : vector<16x32xf32> to vector<16xf32>
    %22 = vector.shape_cast %21 : vector<16xf32> to vector<16x1xf32>
    %cst_9 = arith.constant 0.000000e+00 : f32
    %23 = vector.broadcast %cst_9 : f32 to vector<16x3xf32>
    %24 = tpu.concatenate %3, %5, %16, %19, %22, %23 in 1 : vector<16x1xf32>, vector<16x1xf32>, vector<16x1xf32>, vector<16x1xf32>, vector<16x1xf32>, vector<16x3xf32> -> vector<16x8xf32>
    %c0_10 = arith.constant 0 : index
    %c0_11 = arith.constant 0 : index
    %25 = vector.load %arg3[%c0_10, %c0_11] : memref<16x8xf32, #tpu.memory_space<vmem>>, vector<16x8xf32>
    tpu.vector_store %arg3[%c0_10, %c0_11], %24 {strides = array<i32>} : memref<16x8xf32, #tpu.memory_space<vmem>>, vector<16x8xf32>,
    return
  }
  func.func @transform_0(%arg0: i32) -> (i32, i32) {
    %c0_i32 = arith.constant 0 : i32
    %c0_i32_0 = arith.constant 0 : i32
    return %arg0, %c0_i32 : i32, i32
  }
  func.func @transform_1(%arg0: i32) -> (i32, i32) {
    %c0_i32 = arith.constant 0 : i32
    %c0_i32_0 = arith.constant 0 : i32
    return %arg0, %c0_i32 : i32, i32
  }
  func.func @transform_2(%arg0: i32) -> (i32, i32) {
    %c0_i32 = arith.constant 0 : i32
    %c0_i32_0 = arith.constant 0 : i32
    return %arg0, %c0_i32 : i32, i32
  }
}

</mosaic_0001>

<llo_original>
// kernel: tpu_custom_call.1
$region0: #{tpu_custom_call.1}
  #allocation0 [shape = 'u32[]', space=smem, size = 0x4, offset = 0x4, fixed_abs, tag = 'smem constant byte address 0x4 - core index']
  #allocation1 [shape = 'u32[72,128]{1,0:T(1,128)}', space=vmem, size = 0x9000, scoped, tag = 'internal scratch']
  %s0 = inlined_call_operand.hbm [shape: f32[16,32], index: 0, kind: input, shape index: {}]
  %s1 = inlined_call_operand.hbm [shape: f32[16,32], index: 1, kind: input, shape index: {}]
  %s2 = inlined_call_operand.vmem [shape: f32[16,8], index: 2, kind: output, shape index: {}]
  %s3 = sld [smem:[#allocation0]]
  $region26: #{tpu_custom_call.1} parent=0
    _
  %s5 = ssub.s32 1, %s3
  %s6 = scalar_select 0, %s5, %s3
  $region1: #{tpu_custom_call.1} parent=0
    #allocation2 [shape = 'u8[8192]{0}', space=vmem, size = 0x2000, scoped, tag = 'input window, operand 0, single buffered']
    #allocation3 [shape = 's32[1]{0}', space=sflag, size = 0x4, scoped, tag = 'scoped memory for tpu_custom_call.1']
    #allocation4 [shape = 'u8[8192]{0}', space=vmem, size = 0x2000, scoped, tag = 'input window, operand 1, single buffered']
    #allocation5 [shape = 's32[1]{0}', space=sflag, size = 0x4, scoped, tag = 'scoped memory for tpu_custom_call.1']
    %7 = vsyncpa [#allocation3], 0
    %8 = vsyncpa [#allocation5], 0
    // Predicated region
    $region2: #{tpu_custom_call.1} parent=1 // pred_check
      _
    $region3: #{tpu_custom_call.1} parent=1 // pred_check_branch
      %10 = sbr.rel (0) target = $region5
    $region4: #{tpu_custom_call.1} parent=1 // pred_region
      %12 = vsyncadd [#allocation3], 0
      %s13 = sshll.u32 %s0, 4
      %s14 = int_to_ptr.hbm [resolvable:$true] %s13
      %s15 = sshll.u32 [#allocation2], 4
      %s16 = int_to_ptr.vmem [resolvable:$true] %s15
      %21 = dma.hbm_to_vmem [thread:$0]  %s14, 256, %s16, [#allocation3], 128, 128, 8
    $region5: #{tpu_custom_call.1} parent=1 // pred_fallthru
      _
    // Predicated region
    $region6: #{tpu_custom_call.1} parent=1 // pred_check
      _
    $region7: #{tpu_custom_call.1} parent=1 // pred_check_branch
      %23 = sbr.rel (0) target = $region9
    $region8: #{tpu_custom_call.1} parent=1 // pred_region
      %25 = vsyncadd [#allocation5], 0
      %s26 = sshll.u32 %s1, 4
      %s27 = int_to_ptr.hbm [resolvable:$true] %s26
      %s28 = sshll.u32 [#allocation4], 4
      %s29 = int_to_ptr.vmem [resolvable:$true] %s28
      %34 = dma.hbm_to_vmem [thread:$0]  %s27, 256, %s29, [#allocation5], 128, 128, 8
    $region9: #{tpu_custom_call.1} parent=1 // pred_fallthru
      _
    // Predicated region
    $region10: #{tpu_custom_call.1} parent=1 // pred_check
      _
    $region11: #{tpu_custom_call.1} parent=1 // pred_check_branch
      %36 = sbr.rel (0) target = $region13
    $region12: #{tpu_custom_call.1} parent=1 // pred_region
      %38 = dma.done [#allocation3], 256
    $region13: #{tpu_custom_call.1} parent=1 // pred_fallthru
      _
    // Predicated region
    $region14: #{tpu_custom_call.1} parent=1 // pred_check
      _
    $region15: #{tpu_custom_call.1} parent=1 // pred_check_branch
      %40 = sbr.rel (0) target = $region17
    $region16: #{tpu_custom_call.1} parent=1 // pred_region
      %42 = dma.done [#allocation5], 256
    $region17: #{tpu_custom_call.1} parent=1 // pred_fallthru
      _
    %v43 = vld [vmem:[#allocation2] sm:$0xff]
    %v44 = vld [vmem:[#allocation2 + $0x8] sm:$0xff]
    %v45 = vld [vmem:[#allocation4] sm:$0xff]
    %v46 = vld [vmem:[#allocation4 + $0x8] sm:$0xff]
    %vm47 = vcmask 261120
    %v48 = vsel %vm47, %v43, 0.0
    %49 = vadd.xlane.f32.xlu0 %v48
    %v50 = vpop.xlane.xlu0 %49
    %v51 = vsel %vm47, %v44, 0.0
    %52 = vadd.xlane.f32.xlu0 %v51
    %v53 = vpop.xlane.xlu0 %52
    %v54 = vsel %vm47, %v45, 0.0
    %55 = vadd.xlane.f32.xlu0 %v54
    %v56 = vpop.xlane.xlu0 %55
    %v57 = vsel %vm47, %v46, 0.0
    %58 = vadd.xlane.f32.xlu0 %v57
    %v59 = vpop.xlane.xlu0 %58
    %v60 = vmul.f32 %v50, 0.03125
    %v61 = vmul.f32 %v53, 0.03125
    %v62 = vsub.f32 %v43, %v60
    %v63 = vsub.f32 %v44, %v61
    %v64 = vmul.f32 %v56, 0.03125
    %v65 = vmul.f32 %v59, 0.03125
    %v66 = vsub.f32 %v45, %v64
    %v67 = vsub.f32 %v46, %v65
    %v68 = vmul.f32 %v62, %v66
    %v69 = vmul.f32 %v63, %v67
    %v70 = vsel %vm47, %v68, 0.0
    %71 = vadd.xlane.f32.xlu0 %v70
    %v72 = vpop.xlane.xlu0 %71
    %v73 = vsel %vm47, %v69, 0.0
    %74 = vadd.xlane.f32.xlu0 %v73
    %v75 = vpop.xlane.xlu0 %74
    %v76 = vmul.f32 %v62, %v62
    %v77 = vmul.f32 %v63, %v63
    %v78 = vsel %vm47, %v76, 0.0
    %79 = vadd.xlane.f32.xlu0 %v78
    %v80 = vpop.xlane.xlu0 %79
    %v81 = vsel %vm47, %v77, 0.0
    %82 = vadd.xlane.f32.xlu0 %v81
    %v83 = vpop.xlane.xlu0 %82
    %v84 = vmul.f32 %v66, %v66
    %v85 = vmul.f32 %v67, %v67
    %v86 = vsel %vm47, %v84, 0.0
    %87 = vadd.xlane.f32.xlu0 %v86
    %v88 = vpop.xlane.xlu0 %87
    %v89 = vsel %vm47, %v85, 0.0
    %90 = vadd.xlane.f32.xlu0 %v89
    %v91 = vpop.xlane.xlu0 %90
    %vm92 = vcmask 7168
    %v93 = vsel %vm92, %v50, %v56
    %v94 = vsel %vm92, %v53, %v59
    %vm95 = vcmask 15360
    %v96 = vsel %vm95, %v93, %v72
    %v97 = vsel %vm95, %v94, %v75
    %vm98 = vcmask 23552
    %v99 = vsel %vm98, %v96, %v80
    %v100 = vsel %vm98, %v97, %v83
    %vm101 = vcmask 31744
    %v102 = vsel %vm101, %v99, %v88
    %v103 = vsel %vm101, %v100, %v91
    %vm104 = vcmask 39936
    %v105 = vsel %vm104, %v102, 0.0
    %v106 = vsel %vm104, %v103, 0.0
    %vm107 = vcmask 64512
    %108 = vst.msk [vmem:[%s2] sm:$0xff] %vm107, %v105
    %109 = vst.msk [vmem:[%s2 + $0x8] sm:$0xff] %vm107, %v106
    // Predicated region
    $region18: #{tpu_custom_call.1} parent=1 // pred_check
      _
    $region19: #{tpu_custom_call.1} parent=1 // pred_check_branch
      %111 = sbr.rel (0) target = $region21
    $region20: #{tpu_custom_call.1} parent=1 // pred_region
      _
    $region21: #{tpu_custom_call.1} parent=1 // pred_fallthru
      _
    // Predicated region
    $region22: #{tpu_custom_call.1} parent=1 // pred_check
      _
    $region23: #{tpu_custom_call.1} parent=1 // pred_check_branch
      %113 = sbr.rel (0) target = $region25
    $region24: #{tpu_custom_call.1} parent=1 // pred_region
      _
    $region25: #{tpu_custom_call.1} parent=1 // pred_fallthru
      _
    %114 = vsyncpa [#allocation3], 1
    %115 = vsyncpa [#allocation5], 1

</llo_original>
